<compile_context>
chip_gen: v5e
topology: v5e:2x2
jax: 0.10.0
libtpu: 0.0.40
codegen_flags: <defaults>
</compile_context>

<pallas_src>
import functools

import jax
import jax.numpy as jnp
from jax.experimental import pallas as pl
from jax.experimental.pallas import tpu as pltpu


def _partial_sum_kernel(x_ref, o_ref, acc_ref, *, n_rows, tile_rows,
                        steps_per_core, total_tiles):
    """Accumulate per-core partial sums into an (8,128) f32 vector accumulator."""
    c = pl.program_id(0)   # core-split axis ("parallel")
    i = pl.program_id(1)   # reduction axis ("arbitrary")

    @pl.when(i == 0)
    def _():
        acc_ref[...] = jnp.zeros_like(acc_ref)

    # Global tile index for this step; clamp so the DMA stays in bounds when the
    # tile count does not split evenly across cores (duplicate tiles are masked).
    tile_idx = c * steps_per_core + i
    clamped = jnp.minimum(tile_idx, total_tiles - 1)
    row0 = clamped * tile_rows

    # Mask rows beyond the true extent (Pallas OOB block contents are
    # unspecified) and fully-duplicated tiles.
    rows = row0 + jax.lax.broadcasted_iota(jnp.int32, (tile_rows, 128), 0)
    valid = jnp.logical_and(rows < n_rows, tile_idx < total_tiles)
    xf = jnp.where(valid, x_ref[...].astype(jnp.float32), 0.0)

    # Pure-VPU fold of the tile onto the (8,128) accumulator (no XLU per step).
    acc_ref[...] += xf.reshape(tile_rows // 8, 8, 128).sum(axis=0)

    @pl.when(i == steps_per_core - 1)
    def _():
        o_ref[...] = acc_ref[...]


def transmittance(x, parameter=10.0, t=0.8, *, tile_rows=1024):
    """Compute parameter * (mean(x) - t)^2 with a Pallas TPU kernel."""
    numel = x.size
    lanes = 128
    n_rows = -(-numel // lanes)

    # Tile rows: multiple of 8, clamped so tiny inputs use a single tight block.
    tr = max(8, (int(tile_rows) // 8) * 8)
    tr = min(tr, ((n_rows + 7) // 8) * 8)

    total_tiles = -(-n_rows // tr)
    num_cores = 2 if total_tiles >= 2 else 1          # dual-TC split (v7x); free elsewhere
    steps_per_core = -(-total_tiles // num_cores)

    # Keep native dtype; at most a <128-element lane pad (zeros are sum-neutral).
    flat = x.reshape(-1)
    rem = numel % lanes
    if rem:
        flat = jnp.pad(flat, (0, lanes - rem))
    x2d = flat.reshape(n_rows, lanes)

    def x_index_map(c, i):
        return (jnp.minimum(c * steps_per_core + i, total_tiles - 1), 0)

    kernel = functools.partial(
        _partial_sum_kernel,
        n_rows=n_rows,
        tile_rows=tr,
        steps_per_core=steps_per_core,
        total_tiles=total_tiles,
    )

    partials = pl.pallas_call(
        kernel,
        out_shape=jax.ShapeDtypeStruct((num_cores * 8, lanes), jnp.float32),
        grid_spec=pltpu.PrefetchScalarGridSpec(
            num_scalar_prefetch=0,
            grid=(num_cores, steps_per_core),
            in_specs=[pl.BlockSpec((tr, lanes), x_index_map)],
            # Lane-dense per-core partial-sum slabs; resident across the reduction axis.
            out_specs=pl.BlockSpec((8, lanes), lambda c, i: (c, 0)),
            scratch_shapes=[pltpu.VMEM((8, lanes), jnp.float32)],
        ),
        compiler_params=pltpu.CompilerParams(
            dimension_semantics=("parallel", "arbitrary"),
        ),
    )(x2d)

    # Final scalar math in the wrapper (tiny; keeps parameter/t out of the kernel,
    # so changing them never recompiles the Pallas kernel).
    total = jnp.sum(partials, dtype=jnp.float32)
    mean = total / jnp.float32(numel)
    diff = mean - jnp.asarray(t, jnp.float32)
    return jnp.asarray(parameter, jnp.float32) * diff * diff


def transmittance_ref(x, parameter=10.0, t=0.8):
    return parameter * jnp.square(jnp.sum(x.astype(jnp.float32)) / x.size - t)


if __name__ == "__main__":
    key = jax.random.PRNGKey(0)

    # Coded-aperture style weight tensor, NCHW: (batch=2, channels=4, 16, 16)
    x = jax.random.uniform(key, (2, 4, 16, 16), dtype=jnp.float32)
    out = transmittance(x, parameter=10.0, t=0.8)
    out = jax.block_until_ready(out)
    ref = transmittance_ref(x, parameter=10.0, t=0.8)
    assert jnp.allclose(out, ref, rtol=1e-5, atol=1e-6), (out, ref)

    # Extra check: numel not a multiple of 128 (exercises lane pad + row mask).
    x2 = jax.random.uniform(jax.random.PRNGKey(1), (2, 4, 15, 15), dtype=jnp.float32)
    out2 = jax.block_until_ready(transmittance(x2, parameter=3.0, t=0.5))
    ref2 = transmittance_ref(x2, parameter=3.0, t=0.5)
    assert jnp.allclose(out2, ref2, rtol=1e-5, atol=1e-6), (out2, ref2)

    # Extra check: odd tile count across the 2-core split (exercises clamp + dup mask).
    x3 = jax.random.uniform(jax.random.PRNGKey(2), (2, 4, 16, 17), dtype=jnp.float32)
    out3 = jax.block_until_ready(transmittance(x3, parameter=10.0, t=0.8, tile_rows=8))
    ref3 = transmittance_ref(x3, parameter=10.0, t=0.8)
    assert jnp.allclose(out3, ref3, rtol=1e-5, atol=1e-6), (out3, ref3)

    print("KERNEL_OK")
</pallas_src>

<mosaic_0001>
module attributes {stable_mosaic.version = 11 : i64} {
  func.func @_partial_sum_kernel(%arg0: i32, %arg1: i32, %arg2: memref<16x128xf32, #tpu.memory_space<vmem>>, %arg3: memref<8x128xf32, #tpu.memory_space<vmem>>, %arg4: memref<8x128xf32, #tpu.memory_space<vmem>>) attributes {dimension_semantics = [#tpu.dimension_semantics<parallel>, #tpu.dimension_semantics<arbitrary>], iteration_bounds = array<i64: 1, 1>, scalar_prefetch = 0 : i64, scratch_operands = 1 : i64, tpu.core_type = #tpu.core_type<tc>, window_params = [{transform_indices = @transform_0, window_bounds = array<i64: 16, 128>}, {transform_indices = @transform_1, window_bounds = array<i64: 8, 128>}]} {
    %c0_i32 = arith.constant 0 : i32
    %0 = arith.cmpi eq, %arg1, %c0_i32 : i32
    %1 = arith.extui %0 : i1 to i32
    %c0_i32_0 = arith.constant 0 : i32
    %2 = arith.cmpi ne, %1, %c0_i32_0 : i32
    scf.if %2 {
      %cst_12 = arith.constant 0.000000e+00 : f32
      %26 = vector.broadcast %cst_12 : f32 to vector<8x128xf32>
      %c0_13 = arith.constant 0 : index
      %c0_14 = arith.constant 0 : index
      %27 = vector.load %arg4[%c0_13, %c0_14] : memref<8x128xf32, #tpu.memory_space<vmem>>, vector<8x128xf32>
      tpu.vector_store %arg4[%c0_13, %c0_14], %26 {strides = array<i32>} : memref<8x128xf32, #tpu.memory_space<vmem>>, vector<8x128xf32>,
    } else {
    }
    %c1_i32 = arith.constant 1 : i32
    %3 = arith.muli %arg0, %c1_i32 : i32
    %4 = arith.addi %3, %arg1 : i32
    %c0_i32_1 = arith.constant 0 : i32
    %5 = arith.minsi %4, %c0_i32_1 : i32
    %c16_i32 = arith.constant 16 : i32
    %6 = arith.muli %5, %c16_i32 : i32
    %7 = tpu.iota {dimensions = array<i32: 0>} : vector<16x128xi32>
    %8 = vector.broadcast %6 : i32 to vector<16x128xi32>
    %9 = arith.addi %8, %7 : vector<16x128xi32>
    %c16_i32_2 = arith.constant 16 : i32
    %10 = vector.broadcast %c16_i32_2 : i32 to vector<16x128xi32>
    %11 = arith.cmpi slt, %9, %10 : vector<16x128xi32>
    %c1_i32_3 = arith.constant 1 : i32
    %12 = arith.cmpi slt, %4, %c1_i32_3 : i32
    %13 = vector.broadcast %12 : i1 to vector<16x128xi1>
    %14 = arith.andi %11, %13 : vector<16x128xi1>
    %c0 = arith.constant 0 : index
    %c0_4 = arith.constant 0 : index
    %15 = vector.load %arg2[%c0, %c0_4] : memref<16x128xf32, #tpu.memory_space<vmem>>, vector<16x128xf32>
    %cst = arith.constant 0.000000e+00 : f32
    %16 = vector.broadcast %cst : f32 to vector<16x128xf32>
    %17 = arith.select %14, %15, %16 : vector<16x128xi1>, vector<16x128xf32>
    %c0_5 = arith.constant 0 : index
    %c0_6 = arith.constant 0 : index
    %18 = vector.load %arg4[%c0_5, %c0_6] : memref<8x128xf32, #tpu.memory_space<vmem>>, vector<8x128xf32>
    %19 = vector.shape_cast %17 : vector<16x128xf32> to vector<2x8x128xf32>
    %cst_7 = arith.constant dense<0.000000e+00> : vector<8x128xf32>
    %20 = vector.multi_reduction <add>, %19, %cst_7 [0] : vector<2x8x128xf32> to vector<8x128xf32>
    %21 = arith.addf %18, %20 : vector<8x128xf32>
    %c0_8 = arith.constant 0 : index
    %c0_9 = arith.constant 0 : index
    %22 = vector.load %arg4[%c0_8, %c0_9] : memref<8x128xf32, #tpu.memory_space<vmem>>, vector<8x128xf32>
    tpu.vector_store %arg4[%c0_8, %c0_9], %21 {strides = array<i32>} : memref<8x128xf32, #tpu.memory_space<vmem>>, vector<8x128xf32>,
    %c0_i32_10 = arith.constant 0 : i32
    %23 = arith.cmpi eq, %arg1, %c0_i32_10 : i32
    %24 = arith.extui %23 : i1 to i32
    %c0_i32_11 = arith.constant 0 : i32
    %25 = arith.cmpi ne, %24, %c0_i32_11 : i32
    scf.if %25 {
      %c0_12 = arith.constant 0 : index
      %c0_13 = arith.constant 0 : index
      %26 = vector.load %arg4[%c0_12, %c0_13] : memref<8x128xf32, #tpu.memory_space<vmem>>, vector<8x128xf32>
      %c0_14 = arith.constant 0 : index
      %c0_15 = arith.constant 0 : index
      %27 = vector.load %arg3[%c0_14, %c0_15] : memref<8x128xf32, #tpu.memory_space<vmem>>, vector<8x128xf32>
      tpu.vector_store %arg3[%c0_14, %c0_15], %26 {strides = array<i32>} : memref<8x128xf32, #tpu.memory_space<vmem>>, vector<8x128xf32>,
    } else {
    }
    return
  }
  func.func @transform_0(%arg0: i32, %arg1: i32) -> (i32, i32) {
    %c1_i32 = arith.constant 1 : i32
    %0 = arith.muli %arg0, %c1_i32 : i32
    %1 = arith.addi %0, %arg1 : i32
    %c0_i32 = arith.constant 0 : i32
    %2 = arith.minsi %1, %c0_i32 : i32
    %c0_i32_0 = arith.constant 0 : i32
    %c0_i32_1 = arith.constant 0 : i32
    return %2, %c0_i32_0 : i32, i32
  }
  func.func @transform_1(%arg0: i32, %arg1: i32) -> (i32, i32) {
    %c0_i32 = arith.constant 0 : i32
    %c0_i32_0 = arith.constant 0 : i32
    return %arg0, %c0_i32 : i32, i32
  }
}

</mosaic_0001>

<llo_original>
// kernel: tpu_custom_call.1
$region0: #{tpu_custom_call.1}
  #allocation0 [shape = 'u32[]', space=smem, size = 0x4, offset = 0x4, fixed_abs, tag = 'smem constant byte address 0x4 - core index']
  #allocation1 [shape = 'u32[72,128]{1,0:T(1,128)}', space=vmem, size = 0x9000, scoped, tag = 'internal scratch']
  #allocation2 [shape = 'f32[8,128]{1,0:T(8,128)}', space=vmem, size = 0x1000, scoped, tag = 'scratch operand']
  %s0 = inlined_call_operand.hbm [shape: f32[16,128], index: 0, kind: input, shape index: {}]
  %s1 = inlined_call_operand.hbm [shape: f32[8,128], index: 1, kind: output, shape index: {}]
  %s2 = sld [smem:[#allocation0]]
  $region26: #{tpu_custom_call.1} parent=0
    _
  %s4 = ssub.s32 1, %s2
  %s5 = scalar_select 0, %s4, %s2
  $region1: #{tpu_custom_call.1} parent=0
    #allocation3 [shape = 'u8[8192]{0}', space=vmem, size = 0x2000, scoped, tag = 'input window, operand 0, single buffered']
    #allocation4 [shape = 's32[1]{0}', space=sflag, size = 0x4, scoped, tag = 'scoped memory for tpu_custom_call.1']
    #allocation5 [shape = 's32[1]{0}', space=sflag, size = 0x4, scoped, tag = 'scoped memory for tpu_custom_call.1']
    #allocation6 [shape = 'u8[4096]{0}', space=vmem, size = 0x1000, scoped, tag = 'output window, operand 0, single buffered']
    %6 = vsyncpa [#allocation4], 0
    %7 = vsyncpa [#allocation5], 0
    // Predicated region
    $region2: #{tpu_custom_call.1} parent=1 // pred_check
      _
    $region3: #{tpu_custom_call.1} parent=1 // pred_check_branch
      %9 = sbr.rel (0) target = $region5
    $region4: #{tpu_custom_call.1} parent=1 // pred_region
      %s10 = sadd.s32 0, 0
      %p11 = scmp.lt.s32.totalorder %s10, 0
      %s12 = scalar_select %p11, %s10, 0
      %s13 = smul.u32 2, %s12
      %15 = vsyncadd [#allocation4], 0
      %s16 = smul.addr %s13, 8
      %s17 = scalar_lea.hbm %s0, %s16
      %s18 = sshll.u32 %s17, 4
      %s19 = int_to_ptr.hbm [resolvable:$true] %s18
      %s20 = sshll.u32 [#allocation3], 4
      %s21 = int_to_ptr.vmem [resolvable:$true] %s20
      %26 = dma.hbm_to_vmem [thread:$0]  %s19, 256, %s21, [#allocation4], 128, 128, 8
    $region5: #{tpu_custom_call.1} parent=1 // pred_fallthru
      _
    // Predicated region
    $region6: #{tpu_custom_call.1} parent=1 // pred_check
      _
    $region7: #{tpu_custom_call.1} parent=1 // pred_check_branch
      %28 = sbr.rel (0) target = $region9
    $region8: #{tpu_custom_call.1} parent=1 // pred_region
      %30 = dma.done [#allocation4], 256
    $region9: #{tpu_custom_call.1} parent=1 // pred_fallthru
      _
    %s31 = sadd.s32 0, 0
    %p32 = scmp.lt.s32.totalorder %s31, 0
    %s33 = scalar_select %p32, %s31, 0
    %s34 = smul.u32 2, %s33
    %p35 = scmp.eq.s32.totalorder 0, 0
    // Predicated region
    $region10: #{tpu_custom_call.1} parent=1 // pred_check
      %p36 = pneg %p35
    $region11: #{tpu_custom_call.1} parent=1 // pred_check_branch
      %38 = sbr.rel (%p36) target = $region13
    $region12: #{tpu_custom_call.1} parent=1 // pred_region
      %39 = vst [vmem:[#allocation2] sm:$0xff] 0.0
    $region13: #{tpu_custom_call.1} parent=1 // pred_fallthru
      _
    %s40 = sadd.s32 0, 0
    %p41 = scmp.lt.s32.totalorder %s40, 0
    %s42 = scalar_select %p41, %s40, 0
    %s43 = smul.u32 %s42, 16
    %v44 = vlaneseq
    %v45 = vshrl.u32 %v44, 7
    %v46 = vadd.s32 %v45, 8
    %v47 = vstv %s43
    %v48 = vadd.s32 %v47, %v45
    %v49 = vadd.s32 %v47, %v46
    %vm50 = vcmp.lt.s32.totalorder %v48, 16
    %vm51 = vcmp.lt.s32.totalorder %v49, 16
    %p52 = scmp.lt.s32.totalorder %s40, 1
    %s53 = scalar_select %p52, 1, 0
    %v54 = vstv %s53
    %vm55 = vcmp.eq.s32.totalorder %v54, 1
    %vm56 = vmand %vm50, %vm55
    %vm57 = vmand %vm51, %vm55
    %v58 = vld [vmem:[#allocation3] sm:$0xff]
    %v59 = vld [vmem:[#allocation3 + $0x8] sm:$0xff]
    %v60 = vsel %vm56, %v58, 0.0
    %v61 = vsel %vm57, %v59, 0.0
    %v62 = vld [vmem:[#allocation2] sm:$0xff]
    %v63 = vadd.f32 %v60, %v61
    %v64 = vadd.f32 %v62, %v63
    %65 = vst [vmem:[#allocation2] sm:$0xff] %v64
    // Predicated region
    $region14: #{tpu_custom_call.1} parent=1 // pred_check
      %p66 = pneg %p35
    $region15: #{tpu_custom_call.1} parent=1 // pred_check_branch
      %68 = sbr.rel (%p66) target = $region17
    $region16: #{tpu_custom_call.1} parent=1 // pred_region
      %v69 = vld [vmem:[#allocation2] sm:$0xff]
      %70 = vst [vmem:[#allocation6] sm:$0xff] %v69
    $region17: #{tpu_custom_call.1} parent=1 // pred_fallthru
      _
    // Predicated region
    $region18: #{tpu_custom_call.1} parent=1 // pred_check
      _
    $region19: #{tpu_custom_call.1} parent=1 // pred_check_branch
      %72 = sbr.rel (0) target = $region21
    $region20: #{tpu_custom_call.1} parent=1 // pred_region
      %74 = vsyncadd [#allocation5], 0
      %s76 = sshll.u32 [#allocation6], 4
      %s77 = int_to_ptr.vmem [resolvable:$true] %s76
      %s78 = sshll.u32 %s1, 4
      %s79 = int_to_ptr.hbm [resolvable:$true] %s78
      %81 = dma.vmem_to_hbm [thread:$0]  %s77, 128, %s79, [#allocation5]
    $region21: #{tpu_custom_call.1} parent=1 // pred_fallthru
      _
    // Predicated region
    $region22: #{tpu_custom_call.1} parent=1 // pred_check
      _
    $region23: #{tpu_custom_call.1} parent=1 // pred_check_branch
      %83 = sbr.rel (0) target = $region25
    $region24: #{tpu_custom_call.1} parent=1 // pred_region
      %85 = dma.done [#allocation5], 128
    $region25: #{tpu_custom_call.1} parent=1 // pred_fallthru
      _
    %86 = vsyncpa [#allocation4], 1
    %87 = vsyncpa [#allocation5], 1

</llo_original>
